<compile_context>
chip_gen: v5e
topology: v5e:2x2
jax: 0.10.0
libtpu: 0.0.40
codegen_flags: <defaults>
</compile_context>

<pallas_src>
import functools
from typing import NamedTuple

import jax
import jax.numpy as jnp
from jax.experimental import pallas as pl
from jax.experimental.pallas import tpu as pltpu


def _round_up(a, b):
    return (a + b - 1) // b * b


def _cdiv(a, b):
    return -(-a // b)


def _vmem_bytes_2d(rows, cols, itemsize):
    """VMEM footprint of a 2-D buffer (sublane pad to 8, lane pad to 128)."""
    return _round_up(max(rows, 1), 8) * _round_up(max(cols, 1), 128) * itemsize


# ----------------------------------------------------------------------------
# Kernel body: both matmuls + bias + ReLU + sigmoid fused; the hidden
# activation never leaves VMEM.
# ----------------------------------------------------------------------------
def _simnet_kernel(x_ref, w1_ref, b1_ref, w2_ref, b2_ref, o_ref, *,
                   approx_sigmoid: bool):
    # x_ref:  (tile_m, Din)    w1_ref: (Din, H_p)   b1_ref: (1, H_p)  [f32]
    # w2_ref: (H_p, Dout)      b2_ref: (1, Dout)    [f32]
    # o_ref:  (tile_m, Dout)
    h = jnp.dot(x_ref[...], w1_ref[...], preferred_element_type=jnp.float32)
    h = jnp.maximum(h + b1_ref[...], 0.0)        # bias + ReLU in f32 (VMEM-resident)

    # TODO(synk): for large H, split this second matmul over H chunks with
    # lax.fori_loop(unroll=True) (or add an "arbitrary" K grid axis) instead of
    # keeping the full f32 hidden + resident weights live in VMEM (matters once
    # Din*H_p*4B approaches v7x's scoped-VMEM budget).
    o = jnp.dot(h.astype(w2_ref.dtype), w2_ref[...],
                preferred_element_type=jnp.float32)
    o = o + b2_ref[...]                          # linear2 bias (f32 epilogue)

    # sigmoid: exp on the EUP; reciprocal also routed to the EUP (approx) so the
    # store epilogue does not burn VPU divide slots.
    o_ref[...] = pl.reciprocal(1.0 + jnp.exp(-o),
                               approx=approx_sigmoid).astype(o_ref.dtype)


# ----------------------------------------------------------------------------
# One-time parameter preparation (hoisted out of the per-call hot path).
# ----------------------------------------------------------------------------
class SimNetParams(NamedTuple):
    w1: jax.Array   # (Din, H_p)  transposed, H padded to a lane multiple, matmul dtype
    b1: jax.Array   # (1, H_p)    f32
    w2: jax.Array   # (H_p, Dout) transposed, matmul dtype
    b2: jax.Array   # (1, Dout)   f32
    hidden: int     # true (unpadded) hidden size, for the cost estimate


def prepare_simnet_params(w1, b1, w2, b2, matmul_dtype=None):
    """Prepare SimNet params once (PyTorch layout in: w1[H,Din], w2[Dout,H]).

    Transposes to (in, out) layout, zero-pads only the hidden dim H up to a
    multiple of 128 lanes (numerically safe: padded W1 columns / b1 entries /
    W2 rows are 0, so padded hidden lanes stay exactly 0), and optionally casts
    the matmul operands to bfloat16.  Biases stay f32 (epilogue runs in f32).
    Reuse the result across forwards; this is the only place that pays
    transpose/pad/cast HBM passes.
    """
    H, Din = w1.shape
    Dout, H2 = w2.shape
    assert H2 == H and b1.shape == (H,) and b2.shape == (Dout,)
    wdt = matmul_dtype if matmul_dtype is not None else w1.dtype
    H_p = _round_up(H, 128)
    w1p = jnp.pad(jnp.transpose(w1), ((0, 0), (0, H_p - H))).astype(wdt)
    w2p = jnp.pad(jnp.transpose(w2), ((0, H_p - H), (0, 0))).astype(wdt)
    b1p = jnp.pad(b1, (0, H_p - H)).reshape(1, H_p).astype(jnp.float32)
    b2p = b2.reshape(1, Dout).astype(jnp.float32)
    return SimNetParams(w1p, b1p, w2p, b2p, H)


# ----------------------------------------------------------------------------
# Forward pass.
# ----------------------------------------------------------------------------
def simnet_forward_prepared(x, params: SimNetParams, *, tile_m=1024,
                            approx_sigmoid=True):
    """sigmoid(linear2(relu(linear1(x)))) with prepared params.  x: [M, Din]."""
    M, Din = x.shape
    w1p, b1p, w2p, b2p, H_true = params
    Din_w, H_p = w1p.shape
    assert Din_w == Din
    Dout = w2p.shape[1]

    out_dtype = x.dtype
    if x.dtype != w1p.dtype:
        # bf16 matmul-operand path.  (Callers that already hold bf16
        # activations skip this cast pass entirely.)
        x = x.astype(w1p.dtype)

    # --- batch tiling ------------------------------------------------------
    tile_m = min(tile_m, _round_up(M, 8))
    # v7x has two TensorCores: ensure the "parallel" batch axis has >= 2 steps
    # whenever there is enough work so both cores get a tile.  (Harmless extra
    # ~0.35 us step on single-TC v5e/v6e.)
    if M >= 16 and _cdiv(M, tile_m) < 2:
        tile_m = _round_up(_cdiv(M, 2), 8)
    grid_m = _cdiv(M, tile_m)

    # --- explicit VMEM budget (v7x has only 64 MiB; default scoped 32 MiB) --
    x_isz = jnp.dtype(x.dtype).itemsize
    w_isz = jnp.dtype(w1p.dtype).itemsize
    o_isz = jnp.dtype(out_dtype).itemsize
    vmem_est = (
        2 * _vmem_bytes_2d(tile_m, Din, x_isz)        # x tile (double-buffered)
        + 2 * _vmem_bytes_2d(tile_m, Dout, o_isz)     # out tile (double-buffered)
        + _vmem_bytes_2d(Din, H_p, w_isz)             # W1 (resident, single-buffered)
        + _vmem_bytes_2d(H_p, Dout, w_isz)            # W2 (resident, single-buffered)
        + _vmem_bytes_2d(1, H_p, 4)                   # b1 (f32)
        + _vmem_bytes_2d(1, Dout, 4)                  # b2 (f32)
        + _vmem_bytes_2d(tile_m, H_p, 4)              # hidden activation (f32)
        + _vmem_bytes_2d(tile_m, Dout, 4)             # 2nd-matmul f32 accumulator
    )
    vmem_limit = max(min(2 * vmem_est + (2 << 20), 64 << 20), 8 << 20)

    # --- cost estimate from UNPADDED shapes (padding would overstate cost) --
    flops = int(2 * M * Din * H_true + 2 * M * H_true * Dout
                + 2 * M * H_true + 4 * M * Dout)
    bytes_accessed = int(
        x.size * x_isz
        + w1p.size * w_isz + w2p.size * w_isz
        + b1p.size * 4 + b2p.size * 4
        + M * Dout * o_isz)
    cost = pl.CostEstimate(flops=flops, transcendentals=int(2 * M * Dout),
                           bytes_accessed=bytes_accessed)

    # Grid-invariant operands: fetched once, single-buffered (halves their VMEM
    # footprint — matters on v7x's 64 MiB VMEM when feature dims grow).
    def resident(shape):
        return pl.BlockSpec(shape, lambda i: (0, 0),
                            pipeline_mode=pl.Buffered(1))

    out = pl.pallas_call(
        functools.partial(_simnet_kernel, approx_sigmoid=approx_sigmoid),
        out_shape=jax.ShapeDtypeStruct((M, Dout), out_dtype),
        grid_spec=pltpu.PrefetchScalarGridSpec(
            num_scalar_prefetch=0,
            grid=(grid_m,),
            in_specs=[
                pl.BlockSpec((tile_m, Din), lambda i: (i, 0)),   # x tile (streamed)
                resident((Din, H_p)),                            # W1
                resident((1, H_p)),                              # b1
                resident((H_p, Dout)),                           # W2
                resident((1, Dout)),                             # b2
            ],
            out_specs=pl.BlockSpec((tile_m, Dout), lambda i: (i, 0)),
        ),
        compiler_params=pltpu.CompilerParams(
            dimension_semantics=("parallel",),
            vmem_limit_bytes=int(vmem_limit)),
        cost_estimate=cost,
    )(x, w1p, b1p, w2p, b2p)
    return out


def simnet_forward(x, w1, b1, w2, b2, matmul_dtype=None, **kwargs):
    """One-shot convenience wrapper.  For repeated inference, call
    prepare_simnet_params once and reuse it with simnet_forward_prepared."""
    params = prepare_simnet_params(w1, b1, w2, b2, matmul_dtype=matmul_dtype)
    return simnet_forward_prepared(x, params, **kwargs)


# ----------------------------------------------------------------------------
# Demo / correctness check.
# ----------------------------------------------------------------------------
if __name__ == "__main__":
    # SimNet(input=16, hidden=32, output=8), batch=8 — small deterministic config.
    M, Din, H, Dout = 8, 16, 32, 8

    key = jax.random.PRNGKey(0)
    kx, kw1, kb1, kw2, kb2 = jax.random.split(key, 5)
    x = jax.random.normal(kx, (M, Din), dtype=jnp.float32)

    bound1 = 1.0 / (Din ** 0.5)
    w1 = jax.random.uniform(kw1, (H, Din), jnp.float32, -bound1, bound1)
    b1 = jax.random.uniform(kb1, (H,), jnp.float32, -bound1, bound1)
    bound2 = 1.0 / (H ** 0.5)
    w2 = jax.random.uniform(kw2, (Dout, H), jnp.float32, -bound2, bound2)
    b2 = jax.random.uniform(kb2, (Dout,), jnp.float32, -bound2, bound2)

    # Pure-JAX reference (same semantics as SimNet.forward in PyTorch).
    hp = jnp.maximum(
        jnp.dot(x, w1.T, precision=jax.lax.Precision.HIGHEST) + b1, 0.0)
    ref = jax.nn.sigmoid(
        jnp.dot(hp, w2.T, precision=jax.lax.Precision.HIGHEST) + b2)

    # 1) f32 matmuls + exact sigmoid reciprocal: tight validation path.
    params_f32 = prepare_simnet_params(w1, b1, w2, b2)
    out_exact = jax.block_until_ready(
        simnet_forward_prepared(x, params_f32, approx_sigmoid=False))
    assert out_exact.shape == ref.shape == (M, Dout)
    assert jnp.allclose(out_exact, ref, atol=2e-3, rtol=2e-3)

    # 2) Production f32 path: approx EUP reciprocal in the sigmoid.
    #    Tolerance documents the small relative error of the approximate rcp.
    out_f32 = jax.block_until_ready(simnet_forward_prepared(x, params_f32))
    assert out_f32.shape == (M, Dout)
    assert jnp.allclose(out_f32, ref, atol=5e-3, rtol=5e-3)

    # 3) bf16 matmul-operand path (halved HBM traffic, native bf16 MXU);
    #    accumulation and epilogue stay f32, so error ~ bf16 rounding of operands.
    params_bf16 = prepare_simnet_params(w1, b1, w2, b2,
                                        matmul_dtype=jnp.bfloat16)
    out_bf16 = jax.block_until_ready(simnet_forward_prepared(x, params_bf16))
    assert out_bf16.shape == (M, Dout)
    assert jnp.allclose(out_bf16.astype(jnp.float32), ref, atol=3e-2, rtol=3e-2)

    print("KERNEL_OK")
</pallas_src>

<mosaic_0001>
module attributes {stable_mosaic.version = 11 : i64} {
  func.func @_simnet_kernel(%arg0: i32, %arg1: memref<8x16xf32, #tpu.memory_space<vmem>>, %arg2: memref<16x128xf32, #tpu.memory_space<vmem>>, %arg3: memref<1x128xf32, #tpu.memory_space<vmem>>, %arg4: memref<128x8xf32, #tpu.memory_space<vmem>>, %arg5: memref<1x8xf32, #tpu.memory_space<vmem>>, %arg6: memref<8x8xf32, #tpu.memory_space<vmem>>) attributes {dimension_semantics = [#tpu.dimension_semantics<parallel>], iteration_bounds = array<i64: 1>, scalar_prefetch = 0 : i64, scratch_operands = 0 : i64, tpu.core_type = #tpu.core_type<tc>, window_params = [{transform_indices = @transform_0, window_bounds = array<i64: 8, 16>}, {pipeline_mode = #tpu.pipeline_mode<synchronous>, transform_indices = @transform_1, window_bounds = array<i64: 16, 128>}, {pipeline_mode = #tpu.pipeline_mode<synchronous>, transform_indices = @transform_2, window_bounds = array<i64: 1, 128>}, {pipeline_mode = #tpu.pipeline_mode<synchronous>, transform_indices = @transform_3, window_bounds = array<i64: 128, 8>}, {pipeline_mode = #tpu.pipeline_mode<synchronous>, transform_indices = @transform_4, window_bounds = array<i64: 1, 8>}, {transform_indices = @transform_5, window_bounds = array<i64: 8, 8>}]} {
    %c0 = arith.constant 0 : index
    %c0_0 = arith.constant 0 : index
    %0 = vector.load %arg1[%c0, %c0_0] : memref<8x16xf32, #tpu.memory_space<vmem>>, vector<8x16xf32>
    %c0_1 = arith.constant 0 : index
    %c0_2 = arith.constant 0 : index
    %1 = vector.load %arg2[%c0_1, %c0_2] : memref<16x128xf32, #tpu.memory_space<vmem>>, vector<16x128xf32>
    %cst = arith.constant dense<0.000000e+00> : vector<8x128xf32>
    %2 = tpu.matmul %0, %1, %cst {dimension_numbers = #tpu.dot_dimension_numbers<[1], [0], [0], [1], [0, 0, 1, 1], [], []>} : vector<8x16xf32>, vector<16x128xf32>, vector<8x128xf32> -> vector<8x128xf32>
    %c0_3 = arith.constant 0 : index
    %c0_4 = arith.constant 0 : index
    %3 = vector.load %arg3[%c0_3, %c0_4] : memref<1x128xf32, #tpu.memory_space<vmem>>, vector<1x128xf32>
    %4 = vector.broadcast %3 : vector<1x128xf32> to vector<8x128xf32>
    %5 = arith.addf %2, %4 : vector<8x128xf32>
    %cst_5 = arith.constant 0.000000e+00 : f32
    %6 = vector.broadcast %cst_5 : f32 to vector<8x128xf32>
    %7 = arith.maximumf %5, %6 : vector<8x128xf32>
    %c0_6 = arith.constant 0 : index
    %c0_7 = arith.constant 0 : index
    %8 = vector.load %arg4[%c0_6, %c0_7] : memref<128x8xf32, #tpu.memory_space<vmem>>, vector<128x8xf32>
    %cst_8 = arith.constant dense<0.000000e+00> : vector<8x8xf32>
    %9 = tpu.matmul %7, %8, %cst_8 {dimension_numbers = #tpu.dot_dimension_numbers<[1], [0], [0], [1], [0, 0, 1, 1], [], []>} : vector<8x128xf32>, vector<128x8xf32>, vector<8x8xf32> -> vector<8x8xf32>
    %c0_9 = arith.constant 0 : index
    %c0_10 = arith.constant 0 : index
    %10 = vector.load %arg5[%c0_9, %c0_10] : memref<1x8xf32, #tpu.memory_space<vmem>>, vector<1x8xf32>
    %11 = vector.broadcast %10 : vector<1x8xf32> to vector<8x8xf32>
    %12 = arith.addf %9, %11 : vector<8x8xf32>
    %cst_11 = arith.constant 0.000000e+00 : f32
    %13 = vector.broadcast %cst_11 : f32 to vector<8x8xf32>
    %14 = arith.subf %13, %12 : vector<8x8xf32>
    %15 = math.exp %14 : vector<8x8xf32>
    %cst_12 = arith.constant 1.000000e+00 : f32
    %16 = vector.broadcast %cst_12 : f32 to vector<8x8xf32>
    %17 = arith.addf %16, %15 : vector<8x8xf32>
    %18 = tpu.reciprocal %17 : vector<8x8xf32> -> vector<8x8xf32>
    %c0_13 = arith.constant 0 : index
    %c0_14 = arith.constant 0 : index
    %19 = vector.load %arg6[%c0_13, %c0_14] : memref<8x8xf32, #tpu.memory_space<vmem>>, vector<8x8xf32>
    tpu.vector_store %arg6[%c0_13, %c0_14], %18 {strides = array<i32>} : memref<8x8xf32, #tpu.memory_space<vmem>>, vector<8x8xf32>,
    return
  }
  func.func @transform_0(%arg0: i32) -> (i32, i32) {
    %c0_i32 = arith.constant 0 : i32
    %c0_i32_0 = arith.constant 0 : i32
    return %arg0, %c0_i32 : i32, i32
  }
  func.func @transform_1(%arg0: i32) -> (i32, i32) {
    %c0_i32 = arith.constant 0 : i32
    %c0_i32_0 = arith.constant 0 : i32
    %c0_i32_1 = arith.constant 0 : i32
    return %c0_i32, %c0_i32_0 : i32, i32
  }
  func.func @transform_2(%arg0: i32) -> (i32, i32) {
    %c0_i32 = arith.constant 0 : i32
    %c0_i32_0 = arith.constant 0 : i32
    %c0_i32_1 = arith.constant 0 : i32
    return %c0_i32, %c0_i32_0 : i32, i32
  }
  func.func @transform_3(%arg0: i32) -> (i32, i32) {
    %c0_i32 = arith.constant 0 : i32
    %c0_i32_0 = arith.constant 0 : i32
    %c0_i32_1 = arith.constant 0 : i32
    return %c0_i32, %c0_i32_0 : i32, i32
  }
  func.func @transform_4(%arg0: i32) -> (i32, i32) {
    %c0_i32 = arith.constant 0 : i32
    %c0_i32_0 = arith.constant 0 : i32
    %c0_i32_1 = arith.constant 0 : i32
    return %c0_i32, %c0_i32_0 : i32, i32
  }
  func.func @transform_5(%arg0: i32) -> (i32, i32) {
    %c0_i32 = arith.constant 0 : i32
    %c0_i32_0 = arith.constant 0 : i32
    return %arg0, %c0_i32 : i32, i32
  }
}

</mosaic_0001>

<llo_original>
// kernel: tpu_custom_call.1
$region0: #{tpu_custom_call.1}
  #allocation0 [shape = 'u32[]', space=smem, size = 0x4, offset = 0x4, fixed_abs, tag = 'smem constant byte address 0x4 - core index']
  #allocation1 [shape = 'u32[72,128]{1,0:T(1,128)}', space=vmem, size = 0x9000, scoped, tag = 'internal scratch']
  %s0 = inlined_call_operand.vmem [shape: f32[8,16], index: 0, kind: input, shape index: {}]
  %s1 = inlined_call_operand.vmem [shape: f32[16,128], index: 1, kind: input, shape index: {}]
  %s2 = inlined_call_operand.vmem [shape: f32[1,128], index: 2, kind: input, shape index: {}]
  %s3 = inlined_call_operand.vmem [shape: f32[128,8], index: 3, kind: input, shape index: {}]
  %s4 = inlined_call_operand.vmem [shape: f32[1,8], index: 4, kind: input, shape index: {}]
  %s5 = inlined_call_operand.hbm [shape: f32[8,8], index: 5, kind: output, shape index: {}]
  %s6 = sld [smem:[#allocation0]]
  $region30: #{tpu_custom_call.1} parent=0
    _
  %s8 = ssub.s32 1, %s6
  %s9 = scalar_select 0, %s8, %s6
  $region1: #{tpu_custom_call.1} parent=0
    #allocation2 [shape = 'u8[4096]{0}', space=vmem, size = 0x1000, scoped, tag = 'output window, operand 0, single buffered']
    #allocation3 [shape = 's32[1]{0}', space=sflag, size = 0x4, scoped, tag = 'scoped memory for tpu_custom_call.1']
    %10 = vsyncpa [#allocation3], 0
    // Predicated region
    $region2: #{tpu_custom_call.1} parent=1 // pred_check
      _
    $region3: #{tpu_custom_call.1} parent=1 // pred_check_branch
      %12 = sbr.rel (0) target = $region5
    $region4: #{tpu_custom_call.1} parent=1 // pred_region
      _
    $region5: #{tpu_custom_call.1} parent=1 // pred_fallthru
      _
    // Predicated region
    $region6: #{tpu_custom_call.1} parent=1 // pred_check
      _
    $region7: #{tpu_custom_call.1} parent=1 // pred_check_branch
      %14 = sbr.rel (0) target = $region9
    $region8: #{tpu_custom_call.1} parent=1 // pred_region
      _
    $region9: #{tpu_custom_call.1} parent=1 // pred_fallthru
      _
    // Predicated region
    $region10: #{tpu_custom_call.1} parent=1 // pred_check
      _
    $region11: #{tpu_custom_call.1} parent=1 // pred_check_branch
      %16 = sbr.rel (0) target = $region13
    $region12: #{tpu_custom_call.1} parent=1 // pred_region
      _
    $region13: #{tpu_custom_call.1} parent=1 // pred_fallthru
      _
    // Predicated region
    $region14: #{tpu_custom_call.1} parent=1 // pred_check
      _
    $region15: #{tpu_custom_call.1} parent=1 // pred_check_branch
      %18 = sbr.rel (0) target = $region17
    $region16: #{tpu_custom_call.1} parent=1 // pred_region
      _
    $region17: #{tpu_custom_call.1} parent=1 // pred_fallthru
      _
    // Predicated region
    $region18: #{tpu_custom_call.1} parent=1 // pred_check
      _
    $region19: #{tpu_custom_call.1} parent=1 // pred_check_branch
      %20 = sbr.rel (0) target = $region21
    $region20: #{tpu_custom_call.1} parent=1 // pred_region
      _
    $region21: #{tpu_custom_call.1} parent=1 // pred_fallthru
      _
    %v21 = vld [vmem:[%s0] sm:$0xff]
    %v22 = vld [vmem:[%s1] sm:$0xff]
    %v23 = vld [vmem:[%s1 + $0x8] sm:$0xff]
    %v24 = vld [vmem:[%s2] sm:$0x1]
    %v26 = vperm.slane %v24, 0
    %vm28 = vcmask 130048
    %v30 = vsel %vm28, %v21, 0
    %32 = vmatpush.msra.mxu0 0.0
    %33 = vmatpush.msra.mxu0 0.0
    %34 = vmatpush.msra.mxu0 0.0
    %35 = vmatpush.msra.mxu0 0.0
    %36 = vmatpush.msra.mxu0 0.0
    %37 = vmatpush.msra.mxu0 0.0
    %38 = vmatpush.msra.mxu0 0.0
    %39 = vmatpush.msra.mxu0 0.0
    %40 = vmatpush.msra.mxu0 0.0
    %41 = vmatpush.msra.mxu0 0.0
    %42 = vmatpush.msra.mxu0 0.0
    %43 = vmatpush.msra.mxu0 0.0
    %44 = vmatpush.msra.mxu0 0.0
    %45 = vmatpush.msra.mxu0 0.0
    %46 = vmatpush.msra.mxu0 %v23
    %47 = vmatpush.msra.mxu0 %v22
    %48 = vmatmul.f32.gmra.mxu0 %v30
    %v49 = vpop.f32.mrf.mxu0
    %v50 = vadd.f32 %v26, %v49
    %51 = vdwg.mxu0
    %v52 = vmax.f32 %v50, 0.0
    %v53 = vld [vmem:[%s3] sm:$0xff]
    %v54 = vld [vmem:[%s3 + $0x8] sm:$0xff]
    %v55 = vld [vmem:[%s3 + $0x10] sm:$0xff]
    %v56 = vld [vmem:[%s3 + $0x18] sm:$0xff]
    %v57 = vld [vmem:[%s3 + $0x20] sm:$0xff]
    %v58 = vld [vmem:[%s3 + $0x28] sm:$0xff]
    %v59 = vld [vmem:[%s3 + $0x30] sm:$0xff]
    %v60 = vld [vmem:[%s3 + $0x38] sm:$0xff]
    %v61 = vld [vmem:[%s3 + $0x40] sm:$0xff]
    %v62 = vld [vmem:[%s3 + $0x48] sm:$0xff]
    %v63 = vld [vmem:[%s3 + $0x50] sm:$0xff]
    %v64 = vld [vmem:[%s3 + $0x58] sm:$0xff]
    %v65 = vld [vmem:[%s3 + $0x60] sm:$0xff]
    %v66 = vld [vmem:[%s3 + $0x68] sm:$0xff]
    %v67 = vld [vmem:[%s3 + $0x70] sm:$0xff]
    %v68 = vld [vmem:[%s3 + $0x78] sm:$0xff]
    %v69 = vld [vmem:[%s4] sm:$0x1]
    %v71 = vperm.slane %v69, 0
    %73 = vmatpush.msra.mxu0 %v68
    %74 = vmatpush.msra.mxu0 %v67
    %75 = vmatpush.msra.mxu0 %v66
    %76 = vmatpush.msra.mxu0 %v65
    %77 = vmatpush.msra.mxu0 %v64
    %78 = vmatpush.msra.mxu0 %v63
    %79 = vmatpush.msra.mxu0 %v62
    %80 = vmatpush.msra.mxu0 %v61
    %81 = vmatpush.msra.mxu0 %v60
    %82 = vmatpush.msra.mxu0 %v59
    %83 = vmatpush.msra.mxu0 %v58
    %84 = vmatpush.msra.mxu0 %v57
    %85 = vmatpush.msra.mxu0 %v56
    %86 = vmatpush.msra.mxu0 %v55
    %87 = vmatpush.msra.mxu0 %v54
    %88 = vmatpush.msra.mxu0 %v53
    %89 = vmatmul.f32.gmra.mxu0 %v52
    %v90 = vpop.f32.mrf.mxu0
    %v91 = vadd.f32 %v71, %v90
    %92 = vdwg.mxu0
    %v93 = vsub.f32 0.0, %v91
    %v94 = vmul.f32 %v93, 1.442695
    %v95 = vpow.pop %v94
    %v96 = vadd.f32 %v95, 1.0
    %v97 = vrcp.pop %v96
    %v98 = vmul.f32 %v96, %v97
    %v99 = vsub.f32 1.0, %v98
    %v100 = vmul.f32 %v97, %v99
    %v101 = vadd.f32 %v97, %v100
    %vm102 = vweird.f32 %v96
    %vm103 = vweird.f32 %v97
    %vm104 = vmor %vm102, %vm103
    %v105 = vsel %vm104, %v97, %v101
    %v106 = vand.u32 2147483647, %v96
    %vm107 = vcmp.eq.f32.partialorder %v106, 8.507059e+37
    %v108 = vand.u32 %v96, 2147483648
    %v109 = vor.u32 1.1754944e-38, %v108
    %v110 = vsel %vm107, %v109, %v105
    %vm111 = vcmask 64512
    %112 = vst.msk [vmem:[#allocation2] sm:$0xff] %vm111, %v110
    // Predicated region
    $region22: #{tpu_custom_call.1} parent=1 // pred_check
      _
    $region23: #{tpu_custom_call.1} parent=1 // pred_check_branch
      %114 = sbr.rel (0) target = $region25
    $region24: #{tpu_custom_call.1} parent=1 // pred_region
      %116 = vsyncadd [#allocation3], 0
      %s118 = sshll.u32 [#allocation2], 4
      %s119 = int_to_ptr.vmem [resolvable:$true] %s118
      %s120 = sshll.u32 %s5, 4
      %s121 = int_to_ptr.hbm [resolvable:$true] %s120
      %123 = dma.vmem_to_hbm [thread:$0]  %s119, 128, %s121, [#allocation3]
    $region25: #{tpu_custom_call.1} parent=1 // pred_fallthru
      _
    // Predicated region
    $region26: #{tpu_custom_call.1} parent=1 // pred_check
      _
    $region27: #{tpu_custom_call.1} parent=1 // pred_check_branch
      %125 = sbr.rel (0) target = $region29
    $region28: #{tpu_custom_call.1} parent=1 // pred_region
      %127 = dma.done [#allocation3], 128
    $region29: #{tpu_custom_call.1} parent=1 // pred_fallthru
      _
    %128 = vsyncpa [#allocation3], 1

</llo_original>
